<compile_context>
chip_gen: v7x
topology: tpu7x:2x2x1
jax: 0.10.0
libtpu: 0.0.40
codegen_flags: <defaults>
</compile_context>

<pallas_src>
import functools

import jax
import jax.numpy as jnp
from jax.experimental import pallas as pl
from jax.experimental.pallas import tpu as pltpu


# ----------------------------------------------------------------------------
# Pallas kernel
# ----------------------------------------------------------------------------
def _rnn_encoder_kernel(x_ref,      # (T*B, D)    f32  time-major, flattened
                        mask_ref,   # (T, B, 4H)  f32  1.0 while t < length[b]
                        wih_ref,    # (D, 4H)     f32  W_ih^T
                        whh_ref,    # (4H, 4H)    f32  rows[0:H)=W_hh^T, rest 0
                        b_ref,      # (1, 4H)     f32  b_ih + b_hh
                        freq_ref,   # (B, 1)      f32  attach_freq
                        veff_ref,   # (4H, 1)     f32  attn_w^T @ attn_weight[:,idx], zero-padded
                        beff_ref,   # (1, 1)      f32  attn_b @ attn_weight[:,idx]
                        out_ref,    # (1, 4H)     f32  lanes [0:H) hold the result
                        *, B: int, T: int, H: int, use_attn: bool):
    H4 = 4 * H

    # ---- Hoisted input projection: one MXU matmul, kept in vregs ------------
    xg = jnp.dot(x_ref[...], wih_ref[...],
                 preferred_element_type=jnp.float32) + b_ref[...]   # (T*B, 4H)

    # ---- Lane-constant helpers, hoisted above the recurrence ----------------
    lane = jax.lax.broadcasted_iota(jnp.int32, (B, H4), 1)
    is_g = (lane >= 2 * H) & (lane < 3 * H)          # PyTorch gate order i,f,g,o
    # sigmoid(x) = 0.5*tanh(0.5*x) + 0.5 -> one tanh pass for all four gates.
    pre = jnp.where(is_g, 1.0, 0.5)                  # pre-scale == post-scale
    post_b = jnp.where(is_g, 0.0, 0.5)               # post-bias

    # ---- Serial recurrence, fully unrolled (T small & static) ---------------
    # State lives in vregs; garbage lanes [H:4H) of h contribute nothing to the
    # recurrent matmul because whh_ref rows [H:4H) are zero.
    h = jnp.zeros((B, H4), jnp.float32)
    c = jnp.zeros((B, H4), jnp.float32)

    for t in range(T):
        xg_t = xg[t * B:(t + 1) * B, :]                                # (B, 4H)
        gates = xg_t + jnp.dot(h, whh_ref[...],
                               preferred_element_type=jnp.float32)     # (B, 4H)
        act = jnp.tanh(gates * pre) * pre + post_b    # i,f,o=sigmoid; g=tanh
        i_al = act                                    # lanes [0:H) = i
        f_al = pltpu.roll(act, shift=3 * H, axis=1)   # lanes [0:H) = f
        g_al = pltpu.roll(act, shift=2 * H, axis=1)   # lanes [0:H) = g
        o_al = pltpu.roll(act, shift=1 * H, axis=1)   # lanes [0:H) = o
        c_new = f_al * c + i_al * g_al
        h_new = o_al * jnp.tanh(c_new)
        m = mask_ref[t]                               # (B, 4H) pre-broadcast
        c = c + m * (c_new - c)                       # freeze when t >= length
        h = h + m * (h_new - h)

    # ---- Epilogue: attach_freq weighting (+ optional folded attention) ------
    h_valid = jnp.where(lane < H, h, 0.0)             # zero garbage lanes once
    freq = freq_ref[...]                               # (B, 1)
    inv_f = pl.reciprocal(jnp.sum(freq, axis=0, keepdims=True), approx=True)
    weighted = h_valid * (freq * inv_f)                # (B, 4H), lanes>=H are 0

    if use_attn:
        # score = (Linear(weighted) @ wcol)/0.01 == (weighted @ v_eff + b_eff)*100
        score = (jnp.dot(weighted, veff_ref[...],
                         preferred_element_type=jnp.float32)
                 + beff_ref[...]) * 100.0              # (B, 1)
        mmax = jnp.max(score, axis=0, keepdims=True)
        e = jnp.exp(score - mmax)
        inv_s = pl.reciprocal(jnp.sum(e, axis=0, keepdims=True), approx=True)
        out_ref[...] = jnp.sum(weighted * (e * inv_s), axis=0, keepdims=True)
    else:
        out_ref[...] = jnp.sum(weighted, axis=0, keepdims=True)


# ----------------------------------------------------------------------------
# One-time parameter preprocessing (hoisted out of the per-call path)
# ----------------------------------------------------------------------------
def prepare_rnn_encoder_params(params, idx):
    H = params["w_hh"].shape[1]
    wih_t = params["w_ih"].T.astype(jnp.float32)                        # (D, 4H)
    b2d = (params["b_ih"] + params["b_hh"]).reshape(1, 4 * H).astype(jnp.float32)
    # Pad W_hh^T to (4H, 4H): extra rows are zero so the garbage lanes of the
    # full-vreg h state contribute 0 to the recurrent matmul.
    whh_pad = jnp.zeros((4 * H, 4 * H), jnp.float32)
    whh_pad = whh_pad.at[:H, :].set(params["w_hh"].T.astype(jnp.float32))
    # Fold the linear attention score path: score = x @ v_eff + b_eff (scaled).
    wcol = params["attn_weight"][:, idx].reshape(2 * H, 1).astype(jnp.float32)
    v_eff = params["attn_w"].T.astype(jnp.float32) @ wcol               # (H, 1)
    veff_pad = jnp.zeros((4 * H, 1), jnp.float32).at[:H, :].set(v_eff)  # (4H, 1)
    b_eff = params["attn_b"].reshape(1, 2 * H).astype(jnp.float32) @ wcol  # (1,1)
    return {"wih_t": wih_t, "whh_pad": whh_pad, "b2d": b2d,
            "veff_pad": veff_pad, "beff": b_eff}


# ----------------------------------------------------------------------------
# Per-call wrapper (jitted: all layout plumbing fuses into one dispatch)
# ----------------------------------------------------------------------------
@functools.partial(jax.jit, static_argnames=("attn",))
def rnn_encoder_forward(x_btd, lengths, attach_freq, prep, attn=False):
    """x_btd: (B, T, D) padded batch-first (PyTorch convention)."""
    B, T, D = x_btd.shape
    H4 = prep["whh_pad"].shape[0]
    H = H4 // 4

    x_flat = jnp.transpose(x_btd, (1, 0, 2)).astype(jnp.float32).reshape(T * B, D)
    mask = (jnp.arange(T, dtype=jnp.int32)[:, None]
            < lengths[None, :].astype(jnp.int32))                       # (T, B)
    mask = jnp.broadcast_to(mask[:, :, None], (T, B, H4)).astype(jnp.float32)
    freq2d = attach_freq.astype(jnp.float32).reshape(B, 1)

    kernel = functools.partial(_rnn_encoder_kernel,
                               B=B, T=T, H=H, use_attn=attn)
    vmem = pl.BlockSpec(memory_space=pltpu.MemorySpace.VMEM)

    out = pl.pallas_call(
        kernel,
        out_shape=jax.ShapeDtypeStruct((1, H4), jnp.float32),
        in_specs=[vmem] * 8,
        out_specs=vmem,
    )(x_flat, mask, prep["wih_t"], prep["whh_pad"], prep["b2d"], freq2d,
      prep["veff_pad"], prep["beff"])
    return out[0, :H]                                                    # (H,)


# ----------------------------------------------------------------------------
# Pure-JAX reference (mirrors the PyTorch forward semantics)
# ----------------------------------------------------------------------------
def rnn_encoder_reference(x_btd, lengths, attach_freq, params, idx, attn=False):
    B, T, D = x_btd.shape
    H = params["w_hh"].shape[1]
    h = jnp.zeros((B, H), jnp.float32)
    c = jnp.zeros((B, H), jnp.float32)
    outs = []
    for t in range(T):
        gates = (x_btd[:, t] @ params["w_ih"].T + params["b_ih"]
                 + h @ params["w_hh"].T + params["b_hh"])
        i_g = jax.nn.sigmoid(gates[:, 0 * H:1 * H])
        f_g = jax.nn.sigmoid(gates[:, 1 * H:2 * H])
        g_g = jnp.tanh(gates[:, 2 * H:3 * H])
        o_g = jax.nn.sigmoid(gates[:, 3 * H:4 * H])
        c = f_g * c + i_g * g_g
        h = o_g * jnp.tanh(c)
        outs.append(h)
    outs = jnp.stack(outs, axis=1)                                  # (B, T, H)
    last = outs[jnp.arange(B), lengths - 1]                         # (B, H)
    freq = attach_freq.reshape(B, 1)
    out = last * freq / jnp.sum(freq)
    if not attn:
        return jnp.sum(out, axis=0)
    y = out @ params["attn_w"].T + params["attn_b"]
    score = (y @ params["attn_weight"][:, idx].reshape(-1, 1)) / 0.01
    alpha = jax.nn.softmax(score, axis=0)
    return jnp.sum(out * alpha, axis=0)


# ----------------------------------------------------------------------------
# Driver
# ----------------------------------------------------------------------------
if __name__ == "__main__":
    key = jax.random.PRNGKey(0)

    # Module hyper-params (small, consistent with __init__)
    lemma_dim, pos_dim, dep_dim, dir_dim = 22, 4, 5, 1
    D = lemma_dim + pos_dim + dep_dim + dir_dim                     # input_size = 32
    H = 32                                                          # hidden_size
    path_length = 8                                                 # atten_size
    path_param = {"pos": 10, "dep": 12, "dir": 3}
    vocab = 20
    B, T = 8, 8                                                     # paths, max steps
    idx = 2

    keys = jax.random.split(key, 16)
    k_lstm = 1.0 / jnp.sqrt(H)

    # Embedding tables (deterministic init)
    lemma_tab = jax.random.normal(keys[0], (vocab, lemma_dim), jnp.float32)
    pos_tab = jax.random.normal(keys[1], (path_param["pos"], pos_dim), jnp.float32)
    dep_tab = jax.random.normal(keys[2], (path_param["dep"], dep_dim), jnp.float32)
    dir_tab = jax.random.normal(keys[3], (path_param["dir"], dir_dim), jnp.float32)

    params = {
        "w_ih": jax.random.uniform(keys[4], (4 * H, D), jnp.float32, -k_lstm, k_lstm),
        "w_hh": jax.random.uniform(keys[5], (4 * H, H), jnp.float32, -k_lstm, k_lstm),
        "b_ih": jax.random.uniform(keys[6], (4 * H,), jnp.float32, -k_lstm, k_lstm),
        "b_hh": jax.random.uniform(keys[7], (4 * H,), jnp.float32, -k_lstm, k_lstm),
        "attn_w": jax.random.uniform(keys[8], (2 * H, H), jnp.float32,
                                     -1.0 / jnp.sqrt(H), 1.0 / jnp.sqrt(H)),
        "attn_b": jax.random.uniform(keys[9], (2 * H,), jnp.float32,
                                     -1.0 / jnp.sqrt(H), 1.0 / jnp.sqrt(H)),
        # xavier-uniform-ish for the (2H, atten_size) attention matrix
        "attn_weight": jax.random.uniform(
            keys[10], (2 * H, path_length), jnp.float32,
            -jnp.sqrt(6.0 / (2 * H + path_length)),
            jnp.sqrt(6.0 / (2 * H + path_length))),
    }

    # Build padded, embedded paths (glue mimicking RNNEncoder.padding): each path
    # token is (lemma, pos, dep, dir) ids -> concat of embeddings, padded to T.
    lengths = jnp.array([8, 7, 6, 5, 4, 3, 2, 2], jnp.int32)        # sorted desc
    lemma_ids = jax.random.randint(keys[11], (B, T), 0, vocab)
    pos_ids = jax.random.randint(keys[12], (B, T), 0, path_param["pos"])
    dep_ids = jax.random.randint(keys[13], (B, T), 0, path_param["dep"])
    dir_ids = jax.random.randint(keys[14], (B, T), 0, path_param["dir"])
    emb = jnp.concatenate([lemma_tab[lemma_ids], pos_tab[pos_ids],
                           dep_tab[dep_ids], dir_tab[dir_ids]], axis=-1)  # (B,T,D)
    pad_mask = (jnp.arange(T)[None, :] < lengths[:, None])[..., None]
    x_btd = jnp.where(pad_mask, emb, 0.0).astype(jnp.float32)

    attach_freq = jax.random.uniform(keys[15], (B,), jnp.float32, 0.1, 1.0)

    # One-time weight preprocessing (hoisted out of the per-call path).
    prep = jax.tree_util.tree_map(jax.block_until_ready,
                                  prepare_rnn_encoder_params(params, idx))

    # TODO(synk): nn.LSTM dropout=0.2 is a no-op for num_layers=1 (and eval), so
    # it is intentionally omitted.

    for use_attn in (False, True):
        got = jax.block_until_ready(
            rnn_encoder_forward(x_btd, lengths, attach_freq, prep,
                                attn=use_attn))
        want = rnn_encoder_reference(x_btd, lengths, attach_freq, params, idx,
                                     attn=use_attn)
        assert got.shape == (H,)
        # slightly loose tolerance: approx-reciprocal (EUP vrcp) in the epilogue
        assert jnp.allclose(got, want, rtol=2e-3, atol=3e-4), (
            f"mismatch (attn={use_attn}): max err "
            f"{jnp.max(jnp.abs(got - want))}")

    print("KERNEL_OK")
</pallas_src>

<mosaic_0001>
module attributes {stable_mosaic.version = 11 : i64} {
  func.func @_rnn_encoder_kernel(%arg0: memref<64x32xf32, #tpu.memory_space<vmem>>, %arg1: memref<8x8x128xf32, #tpu.memory_space<vmem>>, %arg2: memref<32x128xf32, #tpu.memory_space<vmem>>, %arg3: memref<128x128xf32, #tpu.memory_space<vmem>>, %arg4: memref<1x128xf32, #tpu.memory_space<vmem>>, %arg5: memref<8x1xf32, #tpu.memory_space<vmem>>, %arg6: memref<128x1xf32, #tpu.memory_space<vmem>>, %arg7: memref<1x1xf32, #tpu.memory_space<vmem>>, %arg8: memref<1x128xf32, #tpu.memory_space<vmem>>) attributes {dimension_semantics = [], scalar_prefetch = 0 : i64, scratch_operands = 0 : i64, tpu.core_type = #tpu.core_type<tc>} {
    %c0 = arith.constant 0 : index
    %c0_0 = arith.constant 0 : index
    %0 = vector.load %arg0[%c0, %c0_0] : memref<64x32xf32, #tpu.memory_space<vmem>>, vector<64x32xf32>
    %c0_1 = arith.constant 0 : index
    %c0_2 = arith.constant 0 : index
    %1 = vector.load %arg2[%c0_1, %c0_2] : memref<32x128xf32, #tpu.memory_space<vmem>>, vector<32x128xf32>
    %cst = arith.constant dense<0.000000e+00> : vector<64x128xf32>
    %2 = tpu.matmul %0, %1, %cst {dimension_numbers = #tpu.dot_dimension_numbers<[1], [0], [0], [1], [0, 0, 1, 1], [], []>} : vector<64x32xf32>, vector<32x128xf32>, vector<64x128xf32> -> vector<64x128xf32>
    %c0_3 = arith.constant 0 : index
    %c0_4 = arith.constant 0 : index
    %3 = vector.load %arg4[%c0_3, %c0_4] : memref<1x128xf32, #tpu.memory_space<vmem>>, vector<1x128xf32>
    %4 = vector.broadcast %3 : vector<1x128xf32> to vector<64x128xf32>
    %5 = arith.addf %2, %4 : vector<64x128xf32>
    %6 = tpu.iota {dimensions = array<i32: 1>} : vector<8x128xi32>
    %c64_i32 = arith.constant 64 : i32
    %7 = vector.broadcast %c64_i32 : i32 to vector<8x128xi32>
    %8 = arith.cmpi sge, %6, %7 : vector<8x128xi32>
    %c96_i32 = arith.constant 96 : i32
    %9 = vector.broadcast %c96_i32 : i32 to vector<8x128xi32>
    %10 = arith.cmpi slt, %6, %9 : vector<8x128xi32>
    %11 = arith.andi %8, %10 : vector<8x128xi1>
    %cst_5 = arith.constant 1.000000e+00 : f32
    %cst_6 = arith.constant 5.000000e-01 : f32
    %12 = vector.broadcast %cst_5 : f32 to vector<8x128xf32>
    %13 = vector.broadcast %cst_6 : f32 to vector<8x128xf32>
    %14 = arith.select %11, %12, %13 : vector<8x128xi1>, vector<8x128xf32>
    %cst_7 = arith.constant 0.000000e+00 : f32
    %cst_8 = arith.constant 5.000000e-01 : f32
    %15 = vector.broadcast %cst_7 : f32 to vector<8x128xf32>
    %16 = vector.broadcast %cst_8 : f32 to vector<8x128xf32>
    %17 = arith.select %11, %15, %16 : vector<8x128xi1>, vector<8x128xf32>
    %cst_9 = arith.constant 0.000000e+00 : f32
    %18 = vector.broadcast %cst_9 : f32 to vector<8x128xf32>
    %cst_10 = arith.constant 0.000000e+00 : f32
    %19 = vector.broadcast %cst_10 : f32 to vector<8x128xf32>
    %20 = vector.extract_strided_slice %5 {offsets = [0, 0], sizes = [8, 128], strides = [1, 1]} : vector<64x128xf32> to vector<8x128xf32>
    %c0_11 = arith.constant 0 : index
    %c0_12 = arith.constant 0 : index
    %21 = vector.load %arg3[%c0_11, %c0_12] : memref<128x128xf32, #tpu.memory_space<vmem>>, vector<128x128xf32>
    %cst_13 = arith.constant dense<0.000000e+00> : vector<8x128xf32>
    %22 = tpu.matmul %18, %21, %cst_13 {dimension_numbers = #tpu.dot_dimension_numbers<[1], [0], [0], [1], [0, 0, 1, 1], [], []>} : vector<8x128xf32>, vector<128x128xf32>, vector<8x128xf32> -> vector<8x128xf32>
    %23 = arith.addf %20, %22 : vector<8x128xf32>
    %24 = arith.mulf %23, %14 : vector<8x128xf32>
    %25 = math.tanh %24 : vector<8x128xf32>
    %26 = arith.mulf %25, %14 : vector<8x128xf32>
    %27 = arith.addf %26, %17 : vector<8x128xf32>
    %c96_i32_14 = arith.constant 96 : i32
    %28 = tpu.dynamic_rotate %27 by %c96_i32_14 dim 1 : vector<8x128xf32>, i32 -> vector<8x128xf32>
    %c64_i32_15 = arith.constant 64 : i32
    %29 = tpu.dynamic_rotate %27 by %c64_i32_15 dim 1 : vector<8x128xf32>, i32 -> vector<8x128xf32>
    %c32_i32 = arith.constant 32 : i32
    %30 = tpu.dynamic_rotate %27 by %c32_i32 dim 1 : vector<8x128xf32>, i32 -> vector<8x128xf32>
    %31 = arith.mulf %28, %19 : vector<8x128xf32>
    %32 = arith.mulf %27, %29 : vector<8x128xf32>
    %33 = arith.addf %31, %32 : vector<8x128xf32>
    %34 = math.tanh %33 : vector<8x128xf32>
    %35 = arith.mulf %30, %34 : vector<8x128xf32>
    %c0_16 = arith.constant 0 : index
    %c0_17 = arith.constant 0 : index
    %c0_18 = arith.constant 0 : index
    %36 = vector.load %arg1[%c0_16, %c0_17, %c0_18] : memref<8x8x128xf32, #tpu.memory_space<vmem>>, vector<1x8x128xf32>
    %37 = vector.shape_cast %36 : vector<1x8x128xf32> to vector<8x128xf32>
    %38 = arith.subf %33, %19 : vector<8x128xf32>
    %39 = arith.mulf %37, %38 : vector<8x128xf32>
    %40 = arith.addf %19, %39 : vector<8x128xf32>
    %41 = arith.subf %35, %18 : vector<8x128xf32>
    %42 = arith.mulf %37, %41 : vector<8x128xf32>
    %43 = arith.addf %18, %42 : vector<8x128xf32>
    %44 = vector.extract_strided_slice %5 {offsets = [8, 0], sizes = [8, 128], strides = [1, 1]} : vector<64x128xf32> to vector<8x128xf32>
    %c0_19 = arith.constant 0 : index
    %c0_20 = arith.constant 0 : index
    %45 = vector.load %arg3[%c0_19, %c0_20] : memref<128x128xf32, #tpu.memory_space<vmem>>, vector<128x128xf32>
    %cst_21 = arith.constant dense<0.000000e+00> : vector<8x128xf32>
    %46 = tpu.matmul %43, %45, %cst_21 {dimension_numbers = #tpu.dot_dimension_numbers<[1], [0], [0], [1], [0, 0, 1, 1], [], []>} : vector<8x128xf32>, vector<128x128xf32>, vector<8x128xf32> -> vector<8x128xf32>
    %47 = arith.addf %44, %46 : vector<8x128xf32>
    %48 = arith.mulf %47, %14 : vector<8x128xf32>
    %49 = math.tanh %48 : vector<8x128xf32>
    %50 = arith.mulf %49, %14 : vector<8x128xf32>
    %51 = arith.addf %50, %17 : vector<8x128xf32>
    %c96_i32_22 = arith.constant 96 : i32
    %52 = tpu.dynamic_rotate %51 by %c96_i32_22 dim 1 : vector<8x128xf32>, i32 -> vector<8x128xf32>
    %c64_i32_23 = arith.constant 64 : i32
    %53 = tpu.dynamic_rotate %51 by %c64_i32_23 dim 1 : vector<8x128xf32>, i32 -> vector<8x128xf32>
    %c32_i32_24 = arith.constant 32 : i32
    %54 = tpu.dynamic_rotate %51 by %c32_i32_24 dim 1 : vector<8x128xf32>, i32 -> vector<8x128xf32>
    %55 = arith.mulf %52, %40 : vector<8x128xf32>
    %56 = arith.mulf %51, %53 : vector<8x128xf32>
    %57 = arith.addf %55, %56 : vector<8x128xf32>
    %58 = math.tanh %57 : vector<8x128xf32>
    %59 = arith.mulf %54, %58 : vector<8x128xf32>
    %c1 = arith.constant 1 : index
    %c0_25 = arith.constant 0 : index
    %c0_26 = arith.constant 0 : index
    %60 = vector.load %arg1[%c1, %c0_25, %c0_26] : memref<8x8x128xf32, #tpu.memory_space<vmem>>, vector<1x8x128xf32>
    %61 = vector.shape_cast %60 : vector<1x8x128xf32> to vector<8x128xf32>
    %62 = arith.subf %57, %40 : vector<8x128xf32>
    %63 = arith.mulf %61, %62 : vector<8x128xf32>
    %64 = arith.addf %40, %63 : vector<8x128xf32>
    %65 = arith.subf %59, %43 : vector<8x128xf32>
    %66 = arith.mulf %61, %65 : vector<8x128xf32>
    %67 = arith.addf %43, %66 : vector<8x128xf32>
    %68 = vector.extract_strided_slice %5 {offsets = [16, 0], sizes = [8, 128], strides = [1, 1]} : vector<64x128xf32> to vector<8x128xf32>
    %c0_27 = arith.constant 0 : index
    %c0_28 = arith.constant 0 : index
    %69 = vector.load %arg3[%c0_27, %c0_28] : memref<128x128xf32, #tpu.memory_space<vmem>>, vector<128x128xf32>
    %cst_29 = arith.constant dense<0.000000e+00> : vector<8x128xf32>
    %70 = tpu.matmul %67, %69, %cst_29 {dimension_numbers = #tpu.dot_dimension_numbers<[1], [0], [0], [1], [0, 0, 1, 1], [], []>} : vector<8x128xf32>, vector<128x128xf32>, vector<8x128xf32> -> vector<8x128xf32>
    %71 = arith.addf %68, %70 : vector<8x128xf32>
    %72 = arith.mulf %71, %14 : vector<8x128xf32>
    %73 = math.tanh %72 : vector<8x128xf32>
    %74 = arith.mulf %73, %14 : vector<8x128xf32>
    %75 = arith.addf %74, %17 : vector<8x128xf32>
    %c96_i32_30 = arith.constant 96 : i32
    %76 = tpu.dynamic_rotate %75 by %c96_i32_30 dim 1 : vector<8x128xf32>, i32 -> vector<8x128xf32>
    %c64_i32_31 = arith.constant 64 : i32
    %77 = tpu.dynamic_rotate %75 by %c64_i32_31 dim 1 : vector<8x128xf32>, i32 -> vector<8x128xf32>
    %c32_i32_32 = arith.constant 32 : i32
    %78 = tpu.dynamic_rotate %75 by %c32_i32_32 dim 1 : vector<8x128xf32>, i32 -> vector<8x128xf32>
    %79 = arith.mulf %76, %64 : vector<8x128xf32>
    %80 = arith.mulf %75, %77 : vector<8x128xf32>
    %81 = arith.addf %79, %80 : vector<8x128xf32>
    %82 = math.tanh %81 : vector<8x128xf32>
    %83 = arith.mulf %78, %82 : vector<8x128xf32>
    %c2 = arith.constant 2 : index
    %c0_33 = arith.constant 0 : index
    %c0_34 = arith.constant 0 : index
    %84 = vector.load %arg1[%c2, %c0_33, %c0_34] : memref<8x8x128xf32, #tpu.memory_space<vmem>>, vector<1x8x128xf32>
    %85 = vector.shape_cast %84 : vector<1x8x128xf32> to vector<8x128xf32>
    %86 = arith.subf %81, %64 : vector<8x128xf32>
    %87 = arith.mulf %85, %86 : vector<8x128xf32>
    %88 = arith.addf %64, %87 : vector<8x128xf32>
    %89 = arith.subf %83, %67 : vector<8x128xf32>
    %90 = arith.mulf %85, %89 : vector<8x128xf32>
    %91 = arith.addf %67, %90 : vector<8x128xf32>
    %92 = vector.extract_strided_slice %5 {offsets = [24, 0], sizes = [8, 128], strides = [1, 1]} : vector<64x128xf32> to vector<8x128xf32>
    %c0_35 = arith.constant 0 : index
    %c0_36 = arith.constant 0 : index
    %93 = vector.load %arg3[%c0_35, %c0_36] : memref<128x128xf32, #tpu.memory_space<vmem>>, vector<128x128xf32>
    %cst_37 = arith.constant dense<0.000000e+00> : vector<8x128xf32>
    %94 = tpu.matmul %91, %93, %cst_37 {dimension_numbers = #tpu.dot_dimension_numbers<[1], [0], [0], [1], [0, 0, 1, 1], [], []>} : vector<8x128xf32>, vector<128x128xf32>, vector<8x128xf32> -> vector<8x128xf32>
    %95 = arith.addf %92, %94 : vector<8x128xf32>
    %96 = arith.mulf %95, %14 : vector<8x128xf32>
    %97 = math.tanh %96 : vector<8x128xf32>
    %98 = arith.mulf %97, %14 : vector<8x128xf32>
    %99 = arith.addf %98, %17 : vector<8x128xf32>
    %c96_i32_38 = arith.constant 96 : i32
    %100 = tpu.dynamic_rotate %99 by %c96_i32_38 dim 1 : vector<8x128xf32>, i32 -> vector<8x128xf32>
    %c64_i32_39 = arith.constant 64 : i32
    %101 = tpu.dynamic_rotate %99 by %c64_i32_39 dim 1 : vector<8x128xf32>, i32 -> vector<8x128xf32>
    %c32_i32_40 = arith.constant 32 : i32
    %102 = tpu.dynamic_rotate %99 by %c32_i32_40 dim 1 : vector<8x128xf32>, i32 -> vector<8x128xf32>
    %103 = arith.mulf %100, %88 : vector<8x128xf32>
    %104 = arith.mulf %99, %101 : vector<8x128xf32>
    %105 = arith.addf %103, %104 : vector<8x128xf32>
    %106 = math.tanh %105 : vector<8x128xf32>
    %107 = arith.mulf %102, %106 : vector<8x128xf32>
    %c3 = arith.constant 3 : index
    %c0_41 = arith.constant 0 : index
    %c0_42 = arith.constant 0 : index
    %108 = vector.load %arg1[%c3, %c0_41, %c0_42] : memref<8x8x128xf32, #tpu.memory_space<vmem>>, vector<1x8x128xf32>
    %109 = vector.shape_cast %108 : vector<1x8x128xf32> to vector<8x128xf32>
    %110 = arith.subf %105, %88 : vector<8x128xf32>
    %111 = arith.mulf %109, %110 : vector<8x128xf32>
    %112 = arith.addf %88, %111 : vector<8x128xf32>
    %113 = arith.subf %107, %91 : vector<8x128xf32>
    %114 = arith.mulf %109, %113 : vector<8x128xf32>
    %115 = arith.addf %91, %114 : vector<8x128xf32>
    %116 = vector.extract_strided_slice %5 {offsets = [32, 0], sizes = [8, 128], strides = [1, 1]} : vector<64x128xf32> to vector<8x128xf32>
    %c0_43 = arith.constant 0 : index
    %c0_44 = arith.constant 0 : index
    %117 = vector.load %arg3[%c0_43, %c0_44] : memref<128x128xf32, #tpu.memory_space<vmem>>, vector<128x128xf32>
    %cst_45 = arith.constant dense<0.000000e+00> : vector<8x128xf32>
    %118 = tpu.matmul %115, %117, %cst_45 {dimension_numbers = #tpu.dot_dimension_numbers<[1], [0], [0], [1], [0, 0, 1, 1], [], []>} : vector<8x128xf32>, vector<128x128xf32>, vector<8x128xf32> -> vector<8x128xf32>
    %119 = arith.addf %116, %118 : vector<8x128xf32>
    %120 = arith.mulf %119, %14 : vector<8x128xf32>
    %121 = math.tanh %120 : vector<8x128xf32>
    %122 = arith.mulf %121, %14 : vector<8x128xf32>
    %123 = arith.addf %122, %17 : vector<8x128xf32>
    %c96_i32_46 = arith.constant 96 : i32
    %124 = tpu.dynamic_rotate %123 by %c96_i32_46 dim 1 : vector<8x128xf32>, i32 -> vector<8x128xf32>
    %c64_i32_47 = arith.constant 64 : i32
    %125 = tpu.dynamic_rotate %123 by %c64_i32_47 dim 1 : vector<8x128xf32>, i32 -> vector<8x128xf32>
    %c32_i32_48 = arith.constant 32 : i32
    %126 = tpu.dynamic_rotate %123 by %c32_i32_48 dim 1 : vector<8x128xf32>, i32 -> vector<8x128xf32>
    %127 = arith.mulf %124, %112 : vector<8x128xf32>
    %128 = arith.mulf %123, %125 : vector<8x128xf32>
    %129 = arith.addf %127, %128 : vector<8x128xf32>
    %130 = math.tanh %129 : vector<8x128xf32>
    %131 = arith.mulf %126, %130 : vector<8x128xf32>
    %c4 = arith.constant 4 : index
    %c0_49 = arith.constant 0 : index
    %c0_50 = arith.constant 0 : index
    %132 = vector.load %arg1[%c4, %c0_49, %c0_50] : memref<8x8x128xf32, #tpu.memory_space<vmem>>, vector<1x8x128xf32>
    %133 = vector.shape_cast %132 : vector<1x8x128xf32> to vector<8x128xf32>
    %134 = arith.subf %129, %112 : vector<8x128xf32>
    %135 = arith.mulf %133, %134 : vector<8x128xf32>
    %136 = arith.addf %112, %135 : vector<8x128xf32>
    %137 = arith.subf %131, %115 : vector<8x128xf32>
    %138 = arith.mulf %133, %137 : vector<8x128xf32>
    %139 = arith.addf %115, %138 : vector<8x128xf32>
    %140 = vector.extract_strided_slice %5 {offsets = [40, 0], sizes = [8, 128], strides = [1, 1]} : vector<64x128xf32> to vector<8x128xf32>
    %c0_51 = arith.constant 0 : index
    %c0_52 = arith.constant 0 : index
    %141 = vector.load %arg3[%c0_51, %c0_52] : memref<128x128xf32, #tpu.memory_space<vmem>>, vector<128x128xf32>
    %cst_53 = arith.constant dense<0.000000e+00> : vector<8x128xf32>
    %142 = tpu.matmul %139, %141, %cst_53 {dimension_numbers = #tpu.dot_dimension_numbers<[1], [0], [0], [1], [0, 0, 1, 1], [], []>} : vector<8x128xf32>, vector<128x128xf32>, vector<8x128xf32> -> vector<8x128xf32>
    %143 = arith.addf %140, %142 : vector<8x128xf32>
    %144 = arith.mulf %143, %14 : vector<8x128xf32>
    %145 = math.tanh %144 : vector<8x128xf32>
    %146 = arith.mulf %145, %14 : vector<8x128xf32>
    %147 = arith.addf %146, %17 : vector<8x128xf32>
    %c96_i32_54 = arith.constant 96 : i32
    %148 = tpu.dynamic_rotate %147 by %c96_i32_54 dim 1 : vector<8x128xf32>, i32 -> vector<8x128xf32>
    %c64_i32_55 = arith.constant 64 : i32
    %149 = tpu.dynamic_rotate %147 by %c64_i32_55 dim 1 : vector<8x128xf32>, i32 -> vector<8x128xf32>
    %c32_i32_56 = arith.constant 32 : i32
    %150 = tpu.dynamic_rotate %147 by %c32_i32_56 dim 1 : vector<8x128xf32>, i32 -> vector<8x128xf32>
    %151 = arith.mulf %148, %136 : vector<8x128xf32>
    %152 = arith.mulf %147, %149 : vector<8x128xf32>
    %153 = arith.addf %151, %152 : vector<8x128xf32>
    %154 = math.tanh %153 : vector<8x128xf32>
    %155 = arith.mulf %150, %154 : vector<8x128xf32>
    %c5 = arith.constant 5 : index
    %c0_57 = arith.constant 0 : index
    %c0_58 = arith.constant 0 : index
    %156 = vector.load %arg1[%c5, %c0_57, %c0_58] : memref<8x8x128xf32, #tpu.memory_space<vmem>>, vector<1x8x128xf32>
    %157 = vector.shape_cast %156 : vector<1x8x128xf32> to vector<8x128xf32>
    %158 = arith.subf %153, %136 : vector<8x128xf32>
    %159 = arith.mulf %157, %158 : vector<8x128xf32>
    %160 = arith.addf %136, %159 : vector<8x128xf32>
    %161 = arith.subf %155, %139 : vector<8x128xf32>
    %162 = arith.mulf %157, %161 : vector<8x128xf32>
    %163 = arith.addf %139, %162 : vector<8x128xf32>
    %164 = vector.extract_strided_slice %5 {offsets = [48, 0], sizes = [8, 128], strides = [1, 1]} : vector<64x128xf32> to vector<8x128xf32>
    %c0_59 = arith.constant 0 : index
    %c0_60 = arith.constant 0 : index
    %165 = vector.load %arg3[%c0_59, %c0_60] : memref<128x128xf32, #tpu.memory_space<vmem>>, vector<128x128xf32>
    %cst_61 = arith.constant dense<0.000000e+00> : vector<8x128xf32>
    %166 = tpu.matmul %163, %165, %cst_61 {dimension_numbers = #tpu.dot_dimension_numbers<[1], [0], [0], [1], [0, 0, 1, 1], [], []>} : vector<8x128xf32>, vector<128x128xf32>, vector<8x128xf32> -> vector<8x128xf32>
    %167 = arith.addf %164, %166 : vector<8x128xf32>
    %168 = arith.mulf %167, %14 : vector<8x128xf32>
    %169 = math.tanh %168 : vector<8x128xf32>
    %170 = arith.mulf %169, %14 : vector<8x128xf32>
    %171 = arith.addf %170, %17 : vector<8x128xf32>
    %c96_i32_62 = arith.constant 96 : i32
    %172 = tpu.dynamic_rotate %171 by %c96_i32_62 dim 1 : vector<8x128xf32>, i32 -> vector<8x128xf32>
    %c64_i32_63 = arith.constant 64 : i32
    %173 = tpu.dynamic_rotate %171 by %c64_i32_63 dim 1 : vector<8x128xf32>, i32 -> vector<8x128xf32>
    %c32_i32_64 = arith.constant 32 : i32
    %174 = tpu.dynamic_rotate %171 by %c32_i32_64 dim 1 : vector<8x128xf32>, i32 -> vector<8x128xf32>
    %175 = arith.mulf %172, %160 : vector<8x128xf32>
    %176 = arith.mulf %171, %173 : vector<8x128xf32>
    %177 = arith.addf %175, %176 : vector<8x128xf32>
    %178 = math.tanh %177 : vector<8x128xf32>
    %179 = arith.mulf %174, %178 : vector<8x128xf32>
    %c6 = arith.constant 6 : index
    %c0_65 = arith.constant 0 : index
    %c0_66 = arith.constant 0 : index
    %180 = vector.load %arg1[%c6, %c0_65, %c0_66] : memref<8x8x128xf32, #tpu.memory_space<vmem>>, vector<1x8x128xf32>
    %181 = vector.shape_cast %180 : vector<1x8x128xf32> to vector<8x128xf32>
    %182 = arith.subf %177, %160 : vector<8x128xf32>
    %183 = arith.mulf %181, %182 : vector<8x128xf32>
    %184 = arith.addf %160, %183 : vector<8x128xf32>
    %185 = arith.subf %179, %163 : vector<8x128xf32>
    %186 = arith.mulf %181, %185 : vector<8x128xf32>
    %187 = arith.addf %163, %186 : vector<8x128xf32>
    %188 = vector.extract_strided_slice %5 {offsets = [56, 0], sizes = [8, 128], strides = [1, 1]} : vector<64x128xf32> to vector<8x128xf32>
    %c0_67 = arith.constant 0 : index
    %c0_68 = arith.constant 0 : index
    %189 = vector.load %arg3[%c0_67, %c0_68] : memref<128x128xf32, #tpu.memory_space<vmem>>, vector<128x128xf32>
    %cst_69 = arith.constant dense<0.000000e+00> : vector<8x128xf32>
    %190 = tpu.matmul %187, %189, %cst_69 {dimension_numbers = #tpu.dot_dimension_numbers<[1], [0], [0], [1], [0, 0, 1, 1], [], []>} : vector<8x128xf32>, vector<128x128xf32>, vector<8x128xf32> -> vector<8x128xf32>
    %191 = arith.addf %188, %190 : vector<8x128xf32>
    %192 = arith.mulf %191, %14 : vector<8x128xf32>
    %193 = math.tanh %192 : vector<8x128xf32>
    %194 = arith.mulf %193, %14 : vector<8x128xf32>
    %195 = arith.addf %194, %17 : vector<8x128xf32>
    %c96_i32_70 = arith.constant 96 : i32
    %196 = tpu.dynamic_rotate %195 by %c96_i32_70 dim 1 : vector<8x128xf32>, i32 -> vector<8x128xf32>
    %c64_i32_71 = arith.constant 64 : i32
    %197 = tpu.dynamic_rotate %195 by %c64_i32_71 dim 1 : vector<8x128xf32>, i32 -> vector<8x128xf32>
    %c32_i32_72 = arith.constant 32 : i32
    %198 = tpu.dynamic_rotate %195 by %c32_i32_72 dim 1 : vector<8x128xf32>, i32 -> vector<8x128xf32>
    %199 = arith.mulf %196, %184 : vector<8x128xf32>
    %200 = arith.mulf %195, %197 : vector<8x128xf32>
    %201 = arith.addf %199, %200 : vector<8x128xf32>
    %202 = math.tanh %201 : vector<8x128xf32>
    %203 = arith.mulf %198, %202 : vector<8x128xf32>
    %c7 = arith.constant 7 : index
    %c0_73 = arith.constant 0 : index
    %c0_74 = arith.constant 0 : index
    %204 = vector.load %arg1[%c7, %c0_73, %c0_74] : memref<8x8x128xf32, #tpu.memory_space<vmem>>, vector<1x8x128xf32>
    %205 = vector.shape_cast %204 : vector<1x8x128xf32> to vector<8x128xf32>
    %206 = arith.subf %203, %187 : vector<8x128xf32>
    %207 = arith.mulf %205, %206 : vector<8x128xf32>
    %208 = arith.addf %187, %207 : vector<8x128xf32>
    %c32_i32_75 = arith.constant 32 : i32
    %209 = vector.broadcast %c32_i32_75 : i32 to vector<8x128xi32>
    %210 = arith.cmpi slt, %6, %209 : vector<8x128xi32>
    %cst_76 = arith.constant 0.000000e+00 : f32
    %211 = vector.broadcast %cst_76 : f32 to vector<8x128xf32>
    %212 = arith.select %210, %208, %211 : vector<8x128xi1>, vector<8x128xf32>
    %c0_77 = arith.constant 0 : index
    %c0_78 = arith.constant 0 : index
    %213 = vector.load %arg5[%c0_77, %c0_78] : memref<8x1xf32, #tpu.memory_space<vmem>>, vector<8x1xf32>
    %cst_79 = arith.constant dense<0.000000e+00> : vector<1xf32>
    %214 = vector.multi_reduction <add>, %213, %cst_79 [0] : vector<8x1xf32> to vector<1xf32>
    %215 = vector.shape_cast %214 : vector<1xf32> to vector<1x1xf32>
    %216 = tpu.reciprocal %215 {approx = true} : vector<1x1xf32> -> vector<1x1xf32>
    %217 = vector.broadcast %216 : vector<1x1xf32> to vector<8x1xf32>
    %218 = arith.mulf %213, %217 : vector<8x1xf32>
    %219 = vector.broadcast %218 : vector<8x1xf32> to vector<8x128xf32>
    %220 = arith.mulf %212, %219 : vector<8x128xf32>
    %cst_80 = arith.constant dense<0.000000e+00> : vector<128xf32>
    %221 = vector.multi_reduction <add>, %220, %cst_80 [0] : vector<8x128xf32> to vector<128xf32>
    %222 = vector.shape_cast %221 : vector<128xf32> to vector<1x128xf32>
    %c0_81 = arith.constant 0 : index
    %c0_82 = arith.constant 0 : index
    %223 = vector.load %arg8[%c0_81, %c0_82] : memref<1x128xf32, #tpu.memory_space<vmem>>, vector<1x128xf32>
    tpu.vector_store %arg8[%c0_81, %c0_82], %222 {strides = array<i32>} : memref<1x128xf32, #tpu.memory_space<vmem>>, vector<1x128xf32>,
    return
  }
}

</mosaic_0001>

<llo_original>
// kernel: rnn_encoder_forward.1
$region0: #{rnn_encoder_forward.1}
  #allocation0 [shape = 'u32[]', space=smem, size = 0x4, offset = 0x4, fixed_abs, tag = 'smem constant byte address 0x4 - core index']
  #allocation1 [shape = 'u32[144,128]{1,0:T(1,128)}', space=vmem, size = 0x12000, scoped, tag = 'internal scratch']
  #allocation2 [shape = 'f32[1,1]{1,0:T(1,128)S(1)}', space=vmem, size = 0x200, scoped, tag = 'scoped memory for rnn_encoder_forward.1']
  %s0 = inlined_call_operand.vmem [shape: f32[64,32], index: 0, kind: input, shape index: {}]
  %s1 = inlined_call_operand.vmem [shape: f32[8,8,128], index: 1, kind: input, shape index: {}]
  %s2 = inlined_call_operand.vmem [shape: f32[32,128], index: 2, kind: input, shape index: {}]
  %s3 = inlined_call_operand.vmem [shape: f32[128,128], index: 3, kind: input, shape index: {}]
  %s4 = inlined_call_operand.vmem [shape: f32[1,128], index: 4, kind: input, shape index: {}]
  %s5 = inlined_call_operand.vmem [shape: f32[8,1], index: 5, kind: input, shape index: {}]
  %s6 = inlined_call_operand.vmem [shape: f32[128,1], index: 6, kind: input, shape index: {}]
  %s7 = inlined_call_operand.<no memory space> [shape: f32[1,1], index: 7, kind: input, shape index: {}]
  %s8 = inlined_call_operand.vmem [shape: f32[1,128], index: 8, kind: output, shape index: {}]
  %s9 = sld [smem:[#allocation0]]
  $region42: #{rnn_encoder_forward.1} parent=0
    _
  %s11 = ssub.s32 1, %s9
  %s12 = scalar_select 0, %s11, %s9
  %v13 = vstv %s7
  %14 = vst [vmem:[#allocation2] sm:$0x1] %v13
  // Predicated region
  $region2: #{rnn_encoder_forward.1} parent=0 // pred_check
    _
  $region3: #{rnn_encoder_forward.1} parent=0 // pred_check_branch
    %16 = sbr.rel (0) target = $region5
  $region4: #{rnn_encoder_forward.1} parent=0 // pred_region
    _
  $region5: #{rnn_encoder_forward.1} parent=0 // pred_fallthru
    _
  // Predicated region
  $region6: #{rnn_encoder_forward.1} parent=0 // pred_check
    _
  $region7: #{rnn_encoder_forward.1} parent=0 // pred_check_branch
    %18 = sbr.rel (0) target = $region9
  $region8: #{rnn_encoder_forward.1} parent=0 // pred_region
    _
  $region9: #{rnn_encoder_forward.1} parent=0 // pred_fallthru
    _
  // Predicated region
  $region10: #{rnn_encoder_forward.1} parent=0 // pred_check
    _
  $region11: #{rnn_encoder_forward.1} parent=0 // pred_check_branch
    %20 = sbr.rel (0) target = $region13
  $region12: #{rnn_encoder_forward.1} parent=0 // pred_region
    _
  $region13: #{rnn_encoder_forward.1} parent=0 // pred_fallthru
    _
  // Predicated region
  $region14: #{rnn_encoder_forward.1} parent=0 // pred_check
    _
  $region15: #{rnn_encoder_forward.1} parent=0 // pred_check_branch
    %22 = sbr.rel (0) target = $region17
  $region16: #{rnn_encoder_forward.1} parent=0 // pred_region
    _
  $region17: #{rnn_encoder_forward.1} parent=0 // pred_fallthru
    _
  // Predicated region
  $region18: #{rnn_encoder_forward.1} parent=0 // pred_check
    _
  $region19: #{rnn_encoder_forward.1} parent=0 // pred_check_branch
    %24 = sbr.rel (0) target = $region21
  $region20: #{rnn_encoder_forward.1} parent=0 // pred_region
    _
  $region21: #{rnn_encoder_forward.1} parent=0 // pred_fallthru
    _
  // Predicated region
  $region22: #{rnn_encoder_forward.1} parent=0 // pred_check
    _
  $region23: #{rnn_encoder_forward.1} parent=0 // pred_check_branch
    %26 = sbr.rel (0) target = $region25
  $region24: #{rnn_encoder_forward.1} parent=0 // pred_region
    _
  $region25: #{rnn_encoder_forward.1} parent=0 // pred_fallthru
    _
  // Predicated region
  $region26: #{rnn_encoder_forward.1} parent=0 // pred_check
    _
  $region27: #{rnn_encoder_forward.1} parent=0 // pred_check_branch
    %28 = sbr.rel (0) target = $region29
  $region28: #{rnn_encoder_forward.1} parent=0 // pred_region
    _
  $region29: #{rnn_encoder_forward.1} parent=0 // pred_fallthru
    _
  // Predicated region
  $region30: #{rnn_encoder_forward.1} parent=0 // pred_check
    _
  $region31: #{rnn_encoder_forward.1} parent=0 // pred_check_branch
    %30 = sbr.rel (0) target = $region33
  $region32: #{rnn_encoder_forward.1} parent=0 // pred_region
    _
  $region33: #{rnn_encoder_forward.1} parent=0 // pred_fallthru
    _
  %v31 = vld [vmem:[%s0] sm:$0xff]
  %v32 = vld [vmem:[%s0 + $0x8] sm:$0xff]
  %v33 = vld [vmem:[%s0 + $0x10] sm:$0xff]
  %v34 = vld [vmem:[%s0 + $0x18] sm:$0xff]
  %v35 = vld [vmem:[%s0 + $0x20] sm:$0xff]
  %v36 = vld [vmem:[%s0 + $0x28] sm:$0xff]
  %v37 = vld [vmem:[%s0 + $0x30] sm:$0xff]
  %v38 = vld [vmem:[%s0 + $0x38] sm:$0xff]
  %v39 = vld [vmem:[%s2] sm:$0xff]
  %v40 = vld [vmem:[%s2 + $0x8] sm:$0xff]
  %v41 = vld [vmem:[%s2 + $0x10] sm:$0xff]
  %v42 = vld [vmem:[%s2 + $0x18] sm:$0xff]
  %v43 = vld [vmem:[%s4] sm:$0x1]
  %v45 = vlaneseq
  %v46 = vshrl.u32 %v45, 7
  %v47 = vsub.s32 0, %v46
  %v48 = vrot.slane %v43, %v47
  %vm50 = vcmask 261120
  %v52 = vsel %vm50, %v31, 0
  %v55 = vsel %vm50, %v32, 0
  %v58 = vsel %vm50, %v33, 0
  %v61 = vsel %vm50, %v34, 0
  %v64 = vsel %vm50, %v35, 0
  %v67 = vsel %vm50, %v36, 0
  %v70 = vsel %vm50, %v37, 0
  %v73 = vsel %vm50, %v38, 0
  %75 = vmatprep.subr.mxu0 0.0
  %76 = vmatpush1.msra.mxu0 %v39
  %77 = vmatprep.subr.mxu0 0.0
  %78 = vmatpush1.msra.mxu0 %v40
  %79 = vmatprep.subr.mxu0 0.0
  %80 = vmatpush1.msra.mxu0 %v41
  %81 = vmatprep.subr.mxu0 0.0
  %82 = vmatpush1.msra.mxu0 %v42
  %83 = vmatprep.subr.mxu0 0.0
  %84 = vmatpush1.msra.mxu0 0.0
  %85 = vmatprep.subr.mxu0 0.0
  %86 = vmatpush1.msra.mxu0 0.0
  %87 = vmatprep.subr.mxu0 0.0
  %88 = vmatpush1.msra.mxu0 0.0
  %89 = vmatprep.subr.mxu0 0.0
  %90 = vmatpush1.msra.mxu0 0.0
  %91 = vmatprep.subr.mxu0 0.0
  %92 = vmatpush1.msra.mxu0 0.0
  %93 = vmatprep.subr.mxu0 0.0
  %94 = vmatpush1.msra.mxu0 0.0
  %95 = vmatprep.subr.mxu0 0.0
  %96 = vmatpush1.msra.mxu0 0.0
  %97 = vmatprep.subr.mxu0 0.0
  %98 = vmatpush1.msra.mxu0 0.0
  %99 = vmatprep.subr.mxu0 0.0
  %100 = vmatpush1.msra.mxu0 0.0
  %101 = vmatprep.subr.mxu0 0.0
  %102 = vmatpush1.msra.mxu0 0.0
  %103 = vmatprep.subr.mxu0 0.0
  %104 = vmatpush1.msra.mxu0 0.0
  %105 = vmatprep.subr.mxu0 0.0
  %106 = vmatpush1.msra.mxu0 0.0
  %107 = vmatprep.subr.mxu0 0.0
  %108 = vmatpush1.msra.mxu0 0.0
  %109 = vmatprep.subr.mxu0 0.0
  %110 = vmatpush1.msra.mxu0 0.0
  %111 = vmatprep.subr.mxu0 0.0
  %112 = vmatpush1.msra.mxu0 0.0
  %113 = vmatprep.subr.mxu0 0.0
  %114 = vmatpush1.msra.mxu0 0.0
  %115 = vmatprep.subr.mxu0 0.0
  %116 = vmatpush1.msra.mxu0 0.0
  %117 = vmatprep.subr.mxu0 0.0
  %118 = vmatpush1.msra.mxu0 0.0
  %119 = vmatprep.subr.mxu0 0.0
  %120 = vmatpush1.msra.mxu0 0.0
  %121 = vmatprep.subr.mxu0 0.0
  %122 = vmatpush1.msra.mxu0 0.0
  %123 = vmatprep.subr.mxu0 0.0
  %124 = vmatpush1.msra.mxu0 0.0
  %125 = vmatprep.subr.mxu0 0.0
  %126 = vmatpush1.msra.mxu0 0.0
  %127 = vmatprep.subr.mxu0 0.0
  %128 = vmatpush1.msra.mxu0 0.0
  %129 = vmatprep.subr.mxu0 0.0
  %130 = vmatpush1.msra.mxu0 0.0
  %131 = vmatprep.subr.mxu0 0.0
  %132 = vmatpush1.msra.mxu0 0.0
  %133 = vmatprep.subr.mxu0 0.0
  %134 = vmatpush1.msra.mxu0 0.0
  %135 = vmatprep.subr.mxu0 0.0
  %136 = vmatpush1.msra.mxu0 0.0
  %137 = vmatprep.subr.mxu0 0.0
  %138 = vmatpush1.msra.mxu0 0.0
  %139 = vmatprep.mubr.f32.mxu0 0.0
  %140 = vmatmul.mubr.f32.gmra.mrb[0].mxu0 %v52
  %v141 = vpop.f32.mrb[0].mxu0
  %v142 = vadd.f32 %v48, %v141
  %v143 = vpop.f32.mrb[0].mxu0
  %144 = vmatprep.mubr.f32.mxu0 0.0
  %145 = vmatmul.mubr.f32.gmra.mrb[0].mxu0 %v55
  %v146 = vpop.f32.mrb[0].mxu0
  %v147 = vadd.f32 %v48, %v146
  %v148 = vpop.f32.mrb[0].mxu0
  %149 = vmatprep.mubr.f32.mxu0 0.0
  %150 = vmatmul.mubr.f32.gmra.mrb[0].mxu0 %v58
  %v151 = vpop.f32.mrb[0].mxu0
  %v152 = vadd.f32 %v48, %v151
  %v153 = vpop.f32.mrb[0].mxu0
  %154 = vmatprep.mubr.f32.mxu0 0.0
  %155 = vmatmul.mubr.f32.gmra.mrb[0].mxu0 %v61
  %v156 = vpop.f32.mrb[0].mxu0
  %v157 = vadd.f32 %v48, %v156
  %v158 = vpop.f32.mrb[0].mxu0
  %159 = vmatprep.mubr.f32.mxu0 0.0
  %160 = vmatmul.mubr.f32.gmra.mrb[0].mxu0 %v64
  %v161 = vpop.f32.mrb[0].mxu0
  %v162 = vadd.f32 %v48, %v161
  %v163 = vpop.f32.mrb[0].mxu0
  %164 = vmatprep.mubr.f32.mxu0 0.0
  %165 = vmatmul.mubr.f32.gmra.mrb[0].mxu0 %v67
  %v166 = vpop.f32.mrb[0].mxu0
  %v167 = vadd.f32 %v48, %v166
  %v168 = vpop.f32.mrb[0].mxu0
  %169 = vmatprep.mubr.f32.mxu0 0.0
  %170 = vmatmul.mubr.f32.gmra.mrb[0].mxu0 %v70
  %v171 = vpop.f32.mrb[0].mxu0
  %v172 = vadd.f32 %v48, %v171
  %v173 = vpop.f32.mrb[0].mxu0
  %174 = vmatprep.mubr.f32.mxu0 0.0
  %175 = vmatmul.mubr.f32.gmra.mrb[0].mxu0 %v73
  %v176 = vpop.f32.mrb[0].mxu0
  %v177 = vadd.f32 %v48, %v176
  %v178 = vpop.f32.mrb[0].mxu0
  %179 = vdwg.mxu0
  %v180 = vlaneseq
  %v181 = vand.u32 %v180, 127
  %vm182 = vcmp.ge.s32.totalorder %v181, 64
  %vm183 = vcmp.lt.s32.totalorder %v181, 96
  %vm184 = vmand %vm182, %vm183
  %v185 = vsel %vm184, 1.0, 0.5
  %v186 = vsel %vm184, 0.0, 0.5
  %v187 = vld [vmem:[%s3] sm:$0xff]
  %v188 = vld [vmem:[%s3 + $0x8] sm:$0xff]
  %v189 = vld [vmem:[%s3 + $0x10] sm:$0xff]
  %v190 = vld [vmem:[%s3 + $0x18] sm:$0xff]
  %v191 = vld [vmem:[%s3 + $0x20] sm:$0xff]
  %v192 = vld [vmem:[%s3 + $0x28] sm:$0xff]
  %v193 = vld [vmem:[%s3 + $0x30] sm:$0xff]
  %v194 = vld [vmem:[%s3 + $0x38] sm:$0xff]
  %v195 = vld [vmem:[%s3 + $0x40] sm:$0xff]
  %v196 = vld [vmem:[%s3 + $0x48] sm:$0xff]
  %v197 = vld [vmem:[%s3 + $0x50] sm:$0xff]
  %v198 = vld [vmem:[%s3 + $0x58] sm:$0xff]
  %v199 = vld [vmem:[%s3 + $0x60] sm:$0xff]
  %v200 = vld [vmem:[%s3 + $0x68] sm:$0xff]
  %v201 = vld [vmem:[%s3 + $0x70] sm:$0xff]
  %v202 = vld [vmem:[%s3 + $0x78] sm:$0xff]
  %203 = vmatprep.subr.mxu0 0.0
  %204 = vmatpush1.msra.mxu0 %v187
  %205 = vmatprep.subr.mxu0 0.0
  %206 = vmatpush1.msra.mxu0 %v188
  %207 = vmatprep.subr.mxu0 0.0
  %208 = vmatpush1.msra.mxu0 %v189
  %209 = vmatprep.subr.mxu0 0.0
  %210 = vmatpush1.msra.mxu0 %v190
  %211 = vmatprep.subr.mxu0 0.0
  %212 = vmatpush1.msra.mxu0 %v191
  %213 = vmatprep.subr.mxu0 0.0
  %214 = vmatpush1.msra.mxu0 %v192
  %215 = vmatprep.subr.mxu0 0.0
  %216 = vmatpush1.msra.mxu0 %v193
  %217 = vmatprep.subr.mxu0 0.0
  %218 = vmatpush1.msra.mxu0 %v194
  %219 = vmatprep.subr.mxu0 0.0
  %220 = vmatpush1.msra.mxu0 %v195
  %221 = vmatprep.subr.mxu0 0.0
  %222 = vmatpush1.msra.mxu0 %v196
  %223 = vmatprep.subr.mxu0 0.0
  %224 = vmatpush1.msra.mxu0 %v197
  %225 = vmatprep.subr.mxu0 0.0
  %226 = vmatpush1.msra.mxu0 %v198
  %227 = vmatprep.subr.mxu0 0.0
  %228 = vmatpush1.msra.mxu0 %v199
  %229 = vmatprep.subr.mxu0 0.0
  %230 = vmatpush1.msra.mxu0 %v200
  %231 = vmatprep.subr.mxu0 0.0
  %232 = vmatpush1.msra.mxu0 %v201
  %233 = vmatprep.subr.mxu0 0.0
  %234 = vmatpush1.msra.mxu0 %v202
  %235 = vmatprep.subr.mxu0 0.0
  %236 = vmatpush1.msra.mxu0 0.0
  %237 = vmatprep.subr.mxu0 0.0
  %238 = vmatpush1.msra.mxu0 0.0
  %239 = vmatprep.subr.mxu0 0.0
  %240 = vmatpush1.msra.mxu0 0.0
  %241 = vmatprep.subr.mxu0 0.0
  %242 = vmatpush1.msra.mxu0 0.0
  %243 = vmatprep.subr.mxu0 0.0
  %244 = vmatpush1.msra.mxu0 0.0
  %245 = vmatprep.subr.mxu0 0.0
  %246 = vmatpush1.msra.mxu0 0.0
  %247 = vmatprep.subr.mxu0 0.0
  %248 = vmatpush1.msra.mxu0 0.0
  %249 = vmatprep.subr.mxu0 0.0
  %250 = vmatpush1.msra.mxu0 0.0
  %251 = vmatprep.subr.mxu0 0.0
  %252 = vmatpush1.msra.mxu0 0.0
  %253 = vmatprep.subr.mxu0 0.0
  %254 = vmatpush1.msra.mxu0 0.0
  %255 = vmatprep.subr.mxu0 0.0
  %256 = vmatpush1.msra.mxu0 0.0
  %257 = vmatprep.subr.mxu0 0.0
  %258 = vmatpush1.msra.mxu0 0.0
  %259 = vmatprep.subr.mxu0 0.0
  %260 = vmatpush1.msra.mxu0 0.0
  %261 = vmatprep.subr.mxu0 0.0
  %262 = vmatpush1.msra.mxu0 0.0
  %263 = vmatprep.subr.mxu0 0.0
  %264 = vmatpush1.msra.mxu0 0.0
  %265 = vmatprep.subr.mxu0 0.0
  %266 = vmatpush1.msra.mxu0 0.0
  %267 = vmatprep.mubr.f32.mxu0 0.0
  %268 = vmatmul.mubr.f32.gmra.mrb[0].mxu0 0.0
  %v269 = vpop.f32.mrb[0].mxu0
  %v270 = vadd.f32 0.0, %v269
  %v271 = vpop.f32.mrb[0].mxu0
  %272 = vdwg.mxu0
  %v273 = vadd.f32 %v142, %v270
  %v274 = vmul.f32 %v273, %v185
  %v275 = vtanh.pop %v274
  %v276 = vmul.f32 %v275, %v185
  %v277 = vadd.f32 %v276, %v186
  %278 = vrot.lane.b32.xlu0 %v277, 96
  %v279 = vpop.permute.xlu0 %278
  %280 = vrot.lane.b32.xlu0 %v277, 64
  %v281 = vpop.permute.xlu0 %280
  %282 = vrot.lane.b32.xlu0 %v277, 32
  %v283 = vpop.permute.xlu0 %282
  %v284 = vmul.f32 %v279, 0.0
  %v285 = vmul.f32 %v277, %v281
  %v286 = vadd.f32 %v284, %v285
  %v287 = vtanh.pop %v286
  %v288 = vmul.f32 %v283, %v287
  %v289 = vld [vmem:[%s1] sm:$0xff]
  %v290 = vmul.f32 %v289, %v286
  %v291 = vadd.f32 %v290, 0.0
  %v292 = vmul.f32 %v289, %v288
  %v293 = vadd.f32 %v292, 0.0
  %294 = vmatprep.subr.mxu0 0.0
  %295 = vmatpush1.msra.mxu0 %v187
  %296 = vmatprep.subr.mxu0 0.0
  %297 = vmatpush1.msra.mxu0 %v188
  %298 = vmatprep.subr.mxu0 0.0
  %299 = vmatpush1.msra.mxu0 %v189
  %300 = vmatprep.subr.mxu0 0.0
  %301 = vmatpush1.msra.mxu0 %v190
  %302 = vmatprep.subr.mxu0 0.0
  %303 = vmatpush1.msra.mxu0 %v191
  %304 = vmatprep.subr.mxu0 0.0
  %305 = vmatpush1.msra.mxu0 %v192
  %306 = vmatprep.subr.mxu0 0.0
  %307 = vmatpush1.msra.mxu0 %v193
  %308 = vmatprep.subr.mxu0 0.0
  %309 = vmatpush1.msra.mxu0 %v194
  %310 = vmatprep.subr.mxu0 0.0
  %311 = vmatpush1.msra.mxu0 %v195
  %312 = vmatprep.subr.mxu0 0.0
  %313 = vmatpush1.msra.mxu0 %v196
  %314 = vmatprep.subr.mxu0 0.0
  %315 = vmatpush1.msra.mxu0 %v197
  %316 = vmatprep.subr.mxu0 0.0
  %317 = vmatpush1.msra.mxu0 %v198
  %318 = vmatprep.subr.mxu0 0.0
  %319 = vmatpush1.msra.mxu0 %v199
  %320 = vmatprep.subr.mxu0 0.0
  %321 = vmatpush1.msra.mxu0 %v200
  %322 = vmatprep.subr.mxu0 0.0
  %323 = vmatpush1.msra.mxu0 %v201
  %324 = vmatprep.subr.mxu0 0.0
  %325 = vmatpush1.msra.mxu0 %v202
  %326 = vmatprep.subr.mxu0 0.0
  %327 = vmatpush1.msra.mxu0 0.0
  %328 = vmatprep.subr.mxu0 0.0
  %329 = vmatpush1.msra.mxu0 0.0
  %330 = vmatprep.subr.mxu0 0.0
  %331 = vmatpush1.msra.mxu0 0.0
  %332 = vmatprep.subr.mxu0 0.0
  %333 = vmatpush1.msra.mxu0 0.0
  %334 = vmatprep.subr.mxu0 0.0
  %335 = vmatpush1.msra.mxu0 0.0
  %336 = vmatprep.subr.mxu0 0.0
  %337 = vmatpush1.msra.mxu0 0.0
  %338 = vmatprep.subr.mxu0 0.0
  %339 = vmatpush1.msra.mxu0 0.0
  %340 = vmatprep.subr.mxu0 0.0
  %341 = vmatpush1.msra.mxu0 0.0
  %342 = vmatprep.subr.mxu0 0.0
  %343 = vmatpush1.msra.mxu0 0.0
  %344 = vmatprep.subr.mxu0 0.0
  %345 = vmatpush1.msra.mxu0 0.0
  %346 = vmatprep.subr.mxu0 0.0
  %347 = vmatpush1.msra.mxu0 0.0
  %348 = vmatprep.subr.mxu0 0.0
  %349 = vmatpush1.msra.mxu0 0.0
  %350 = vmatprep.subr.mxu0 0.0
  %351 = vmatpush1.msra.mxu0 0.0
  %352 = vmatprep.subr.mxu0 0.0
  %353 = vmatpush1.msra.mxu0 0.0
  %354 = vmatprep.subr.mxu0 0.0
  %355 = vmatpush1.msra.mxu0 0.0
  %356 = vmatprep.subr.mxu0 0.0
  %357 = vmatpush1.msra.mxu0 0.0
  %358 = vmatprep.mubr.f32.mxu0 0.0
  %359 = vmatmul.mubr.f32.gmra.mrb[0].mxu0 %v293
  %v360 = vpop.f32.mrb[0].mxu0
  %v361 = vadd.f32 0.0, %v360
  %v362 = vpop.f32.mrb[0].mxu0
  %363 = vdwg.mxu0
  %v364 = vadd.f32 %v147, %v361
  %v365 = vmul.f32 %v364, %v185
  %v366 = vtanh.pop %v365
  %v367 = vmul.f32 %v366, %v185
  %v368 = vadd.f32 %v367, %v186
  %369 = vrot.lane.b32.xlu0 %v368, 96
  %v370 = vpop.permute.xlu0 %369
  %371 = vrot.lane.b32.xlu0 %v368, 64
  %v372 = vpop.permute.xlu0 %371
  %373 = vrot.lane.b32.xlu0 %v368, 32
  %v374 = vpop.permute.xlu0 %373
  %v375 = vmul.f32 %v370, %v291
  %v376 = vmul.f32 %v368, %v372
  %v377 = vadd.f32 %v375, %v376
  %v378 = vtanh.pop %v377
  %v379 = vmul.f32 %v374, %v378
  %s380 = scalar_lea.vmem %s1, 8
  %v381 = vld [vmem:[%s380] sm:$0xff]
  %v382 = vsub.f32 %v377, %v291
  %v383 = vmul.f32 %v381, %v382
  %v384 = vadd.f32 %v291, %v383
  %v385 = vsub.f32 %v379, %v293
  %v386 = vmul.f32 %v381, %v385
  %v387 = vadd.f32 %v293, %v386
  %388 = vmatprep.subr.mxu0 0.0
  %389 = vmatpush1.msra.mxu0 %v187
  %390 = vmatprep.subr.mxu0 0.0
  %391 = vmatpush1.msra.mxu0 %v188
  %392 = vmatprep.subr.mxu0 0.0
  %393 = vmatpush1.msra.mxu0 %v189
  %394 = vmatprep.subr.mxu0 0.0
  %395 = vmatpush1.msra.mxu0 %v190
  %396 = vmatprep.subr.mxu0 0.0
  %397 = vmatpush1.msra.mxu0 %v191
  %398 = vmatprep.subr.mxu0 0.0
  %399 = vmatpush1.msra.mxu0 %v192
  %400 = vmatprep.subr.mxu0 0.0
  %401 = vmatpush1.msra.mxu0 %v193
  %402 = vmatprep.subr.mxu0 0.0
  %403 = vmatpush1.msra.mxu0 %v194
  %404 = vmatprep.subr.mxu0 0.0
  %405 = vmatpush1.msra.mxu0 %v195
  %406 = vmatprep.subr.mxu0 0.0
  %407 = vmatpush1.msra.mxu0 %v196
  %408 = vmatprep.subr.mxu0 0.0
  %409 = vmatpush1.msra.mxu0 %v197
  %410 = vmatprep.subr.mxu0 0.0
  %411 = vmatpush1.msra.mxu0 %v198
  %412 = vmatprep.subr.mxu0 0.0
  %413 = vmatpush1.msra.mxu0 %v199
  %414 = vmatprep.subr.mxu0 0.0
  %415 = vmatpush1.msra.mxu0 %v200
  %416 = vmatprep.subr.mxu0 0.0
  %417 = vmatpush1.msra.mxu0 %v201
  %418 = vmatprep.subr.mxu0 0.0
  %419 = vmatpush1.msra.mxu0 %v202
  %420 = vmatprep.subr.mxu0 0.0
  %421 = vmatpush1.msra.mxu0 0.0
  %422 = vmatprep.subr.mxu0 0.0
  %423 = vmatpush1.msra.mxu0 0.0
  %424 = vmatprep.subr.mxu0 0.0
  %425 = vmatpush1.msra.mxu0 0.0
  %426 = vmatprep.subr.mxu0 0.0
  %427 = vmatpush1.msra.mxu0 0.0
  %428 = vmatprep.subr.mxu0 0.0
  %429 = vmatpush1.msra.mxu0 0.0
  %430 = vmatprep.subr.mxu0 0.0
  %431 = vmatpush1.msra.mxu0 0.0
  %432 = vmatprep.subr.mxu0 0.0
  %433 = vmatpush1.msra.mxu0 0.0
  %434 = vmatprep.subr.mxu0 0.0
  %435 = vmatpush1.msra.mxu0 0.0
  %436 = vmatprep.subr.mxu0 0.0
  %437 = vmatpush1.msra.mxu0 0.0
  %438 = vmatprep.subr.mxu0 0.0
  %439 = vmatpush1.msra.mxu0 0.0
  %440 = vmatprep.subr.mxu0 0.0
  %441 = vmatpush1.msra.mxu0 0.0
  %442 = vmatprep.subr.mxu0 0.0
  %443 = vmatpush1.msra.mxu0 0.0
  %444 = vmatprep.subr.mxu0 0.0
  %445 = vmatpush1.msra.mxu0 0.0
  %446 = vmatprep.subr.mxu0 0.0
  %447 = vmatpush1.msra.mxu0 0.0
  %448 = vmatprep.subr.mxu0 0.0
  %449 = vmatpush1.msra.mxu0 0.0
  %450 = vmatprep.subr.mxu0 0.0
  %451 = vmatpush1.msra.mxu0 0.0
  %452 = vmatprep.mubr.f32.mxu0 0.0
  %453 = vmatmul.mubr.f32.gmra.mrb[0].mxu0 %v387
  %v454 = vpop.f32.mrb[0].mxu0
  %v455 = vadd.f32 0.0, %v454
  %v456 = vpop.f32.mrb[0].mxu0
  %457 = vdwg.mxu0
  %v458 = vadd.f32 %v152, %v455
  %v459 = vmul.f32 %v458, %v185
  %v460 = vtanh.pop %v459
  %v461 = vmul.f32 %v460, %v185
  %v462 = vadd.f32 %v461, %v186
  %463 = vrot.lane.b32.xlu0 %v462, 96
  %v464 = vpop.permute.xlu0 %463
  %465 = vrot.lane.b32.xlu0 %v462, 64
  %v466 = vpop.permute.xlu0 %465
  %467 = vrot.lane.b32.xlu0 %v462, 32
  %v468 = vpop.permute.xlu0 %467
  %v469 = vmul.f32 %v464, %v384
  %v470 = vmul.f32 %v462, %v466
  %v471 = vadd.f32 %v469, %v470
  %v472 = vtanh.pop %v471
  %v473 = vmul.f32 %v468, %v472
  %s474 = scalar_lea.vmem %s1, 16
  %v475 = vld [vmem:[%s474] sm:$0xff]
  %v476 = vsub.f32 %v471, %v384
  %v477 = vmul.f32 %v475, %v476
  %v478 = vadd.f32 %v384, %v477
  %v479 = vsub.f32 %v473, %v387
  %v480 = vmul.f32 %v475, %v479
  %v481 = vadd.f32 %v387, %v480
  %482 = vmatprep.subr.mxu0 0.0
  %483 = vmatpush1.msra.mxu0 %v187
  %484 = vmatprep.subr.mxu0 0.0
  %485 = vmatpush1.msra.mxu0 %v188
  %486 = vmatprep.subr.mxu0 0.0
  %487 = vmatpush1.msra.mxu0 %v189
  %488 = vmatprep.subr.mxu0 0.0
  %489 = vmatpush1.msra.mxu0 %v190
  %490 = vmatprep.subr.mxu0 0.0
  %491 = vmatpush1.msra.mxu0 %v191
  %492 = vmatprep.subr.mxu0 0.0
  %493 = vmatpush1.msra.mxu0 %v192
  %494 = vmatprep.subr.mxu0 0.0
  %495 = vmatpush1.msra.mxu0 %v193
  %496 = vmatprep.subr.mxu0 0.0
  %497 = vmatpush1.msra.mxu0 %v194
  %498 = vmatprep.subr.mxu0 0.0
  %499 = vmatpush1.msra.mxu0 %v195
  %500 = vmatprep.subr.mxu0 0.0
  %501 = vmatpush1.msra.mxu0 %v196
  %502 = vmatprep.subr.mxu0 0.0
  %503 = vmatpush1.msra.mxu0 %v197
  %504 = vmatprep.subr.mxu0 0.0
  %505 = vmatpush1.msra.mxu0 %v198
  %506 = vmatprep.subr.mxu0 0.0
  %507 = vmatpush1.msra.mxu0 %v199
  %508 = vmatprep.subr.mxu0 0.0
  %509 = vmatpush1.msra.mxu0 %v200
  %510 = vmatprep.subr.mxu0 0.0
  %511 = vmatpush1.msra.mxu0 %v201
  %512 = vmatprep.subr.mxu0 0.0
  %513 = vmatpush1.msra.mxu0 %v202
  %514 = vmatprep.subr.mxu0 0.0
  %515 = vmatpush1.msra.mxu0 0.0
  %516 = vmatprep.subr.mxu0 0.0
  %517 = vmatpush1.msra.mxu0 0.0
  %518 = vmatprep.subr.mxu0 0.0
  %519 = vmatpush1.msra.mxu0 0.0
  %520 = vmatprep.subr.mxu0 0.0
  %521 = vmatpush1.msra.mxu0 0.0
  %522 = vmatprep.subr.mxu0 0.0
  %523 = vmatpush1.msra.mxu0 0.0
  %524 = vmatprep.subr.mxu0 0.0
  %525 = vmatpush1.msra.mxu0 0.0
  %526 = vmatprep.subr.mxu0 0.0
  %527 = vmatpush1.msra.mxu0 0.0
  %528 = vmatprep.subr.mxu0 0.0
  %529 = vmatpush1.msra.mxu0 0.0
  %530 = vmatprep.subr.mxu0 0.0
  %531 = vmatpush1.msra.mxu0 0.0
  %532 = vmatprep.subr.mxu0 0.0
  %533 = vmatpush1.msra.mxu0 0.0
  %534 = vmatprep.subr.mxu0 0.0
  %535 = vmatpush1.msra.mxu0 0.0
  %536 = vmatprep.subr.mxu0 0.0
  %537 = vmatpush1.msra.mxu0 0.0
  %538 = vmatprep.subr.mxu0 0.0
  %539 = vmatpush1.msra.mxu0 0.0
  %540 = vmatprep.subr.mxu0 0.0
  %541 = vmatpush1.msra.mxu0 0.0
  %542 = vmatprep.subr.mxu0 0.0
  %543 = vmatpush1.msra.mxu0 0.0
  %544 = vmatprep.subr.mxu0 0.0
  %545 = vmatpush1.msra.mxu0 0.0
  %546 = vmatprep.mubr.f32.mxu0 0.0
  %547 = vmatmul.mubr.f32.gmra.mrb[0].mxu0 %v481
  %v548 = vpop.f32.mrb[0].mxu0
  %v549 = vadd.f32 0.0, %v548
  %v550 = vpop.f32.mrb[0].mxu0
  %551 = vdwg.mxu0
  %v552 = vadd.f32 %v157, %v549
  %v553 = vmul.f32 %v552, %v185
  %v554 = vtanh.pop %v553
  %v555 = vmul.f32 %v554, %v185
  %v556 = vadd.f32 %v555, %v186
  %557 = vrot.lane.b32.xlu0 %v556, 96
  %v558 = vpop.permute.xlu0 %557
  %559 = vrot.lane.b32.xlu0 %v556, 64
  %v560 = vpop.permute.xlu0 %559
  %561 = vrot.lane.b32.xlu0 %v556, 32
  %v562 = vpop.permute.xlu0 %561
  %v563 = vmul.f32 %v558, %v478
  %v564 = vmul.f32 %v556, %v560
  %v565 = vadd.f32 %v563, %v564
  %v566 = vtanh.pop %v565
  %v567 = vmul.f32 %v562, %v566
  %s568 = scalar_lea.vmem %s1, 24
  %v569 = vld [vmem:[%s568] sm:$0xff]
  %v570 = vsub.f32 %v565, %v478
  %v571 = vmul.f32 %v569, %v570
  %v572 = vadd.f32 %v478, %v571
  %v573 = vsub.f32 %v567, %v481
  %v574 = vmul.f32 %v569, %v573
  %v575 = vadd.f32 %v481, %v574
  %576 = vmatprep.subr.mxu0 0.0
  %577 = vmatpush1.msra.mxu0 %v187
  %578 = vmatprep.subr.mxu0 0.0
  %579 = vmatpush1.msra.mxu0 %v188
  %580 = vmatprep.subr.mxu0 0.0
  %581 = vmatpush1.msra.mxu0 %v189
  %582 = vmatprep.subr.mxu0 0.0
  %583 = vmatpush1.msra.mxu0 %v190
  %584 = vmatprep.subr.mxu0 0.0
  %585 = vmatpush1.msra.mxu0 %v191
  %586 = vmatprep.subr.mxu0 0.0
  %587 = vmatpush1.msra.mxu0 %v192
  %588 = vmatprep.subr.mxu0 0.0
  %589 = vmatpush1.msra.mxu0 %v193
  %590 = vmatprep.subr.mxu0 0.0
  %591 = vmatpush1.msra.mxu0 %v194
  %592 = vmatprep.subr.mxu0 0.0
  %593 = vmatpush1.msra.mxu0 %v195
  %594 = vmatprep.subr.mxu0 0.0
  %595 = vmatpush1.msra.mxu0 %v196
  %596 = vmatprep.subr.mxu0 0.0
  %597 = vmatpush1.msra.mxu0 %v197
  %598 = vmatprep.subr.mxu0 0.0
  %599 = vmatpush1.msra.mxu0 %v198
  %600 = vmatprep.subr.mxu0 0.0
  %601 = vmatpush1.msra.mxu0 %v199
  %602 = vmatprep.subr.mxu0 0.0
  %603 = vmatpush1.msra.mxu0 %v200
  %604 = vmatprep.subr.mxu0 0.0
  %605 = vmatpush1.msra.mxu0 %v201
  %606 = vmatprep.subr.mxu0 0.0
  %607 = vmatpush1.msra.mxu0 %v202
  %608 = vmatprep.subr.mxu0 0.0
  %609 = vmatpush1.msra.mxu0 0.0
  %610 = vmatprep.subr.mxu0 0.0
  %611 = vmatpush1.msra.mxu0 0.0
  %612 = vmatprep.subr.mxu0 0.0
  %613 = vmatpush1.msra.mxu0 0.0
  %614 = vmatprep.subr.mxu0 0.0
  %615 = vmatpush1.msra.mxu0 0.0
  %616 = vmatprep.subr.mxu0 0.0
  %617 = vmatpush1.msra.mxu0 0.0
  %618 = vmatprep.subr.mxu0 0.0
  %619 = vmatpush1.msra.mxu0 0.0
  %620 = vmatprep.subr.mxu0 0.0
  %621 = vmatpush1.msra.mxu0 0.0
  %622 = vmatprep.subr.mxu0 0.0
  %623 = vmatpush1.msra.mxu0 0.0
  %624 = vmatprep.subr.mxu0 0.0
  %625 = vmatpush1.msra.mxu0 0.0
  %626 = vmatprep.subr.mxu0 0.0
  %627 = vmatpush1.msra.mxu0 0.0
  %628 = vmatprep.subr.mxu0 0.0
  %629 = vmatpush1.msra.mxu0 0.0
  %630 = vmatprep.subr.mxu0 0.0
  %631 = vmatpush1.msra.mxu0 0.0
  %632 = vmatprep.subr.mxu0 0.0
  %633 = vmatpush1.msra.mxu0 0.0
  %634 = vmatprep.subr.mxu0 0.0
  %635 = vmatpush1.msra.mxu0 0.0
  %636 = vmatprep.subr.mxu0 0.0
  %637 = vmatpush1.msra.mxu0 0.0
  %638 = vmatprep.subr.mxu0 0.0
  %639 = vmatpush1.msra.mxu0 0.0
  %640 = vmatprep.mubr.f32.mxu0 0.0
  %641 = vmatmul.mubr.f32.gmra.mrb[0].mxu0 %v575
  %v642 = vpop.f32.mrb[0].mxu0
  %v643 = vadd.f32 0.0, %v642
  %v644 = vpop.f32.mrb[0].mxu0
  %645 = vdwg.mxu0
  %v646 = vadd.f32 %v162, %v643
  %v647 = vmul.f32 %v646, %v185
  %v648 = vtanh.pop %v647
  %v649 = vmul.f32 %v648, %v185
  %v650 = vadd.f32 %v649, %v186
  %651 = vrot.lane.b32.xlu0 %v650, 96
  %v652 = vpop.permute.xlu0 %651
  %653 = vrot.lane.b32.xlu0 %v650, 64
  %v654 = vpop.permute.xlu0 %653
  %655 = vrot.lane.b32.xlu0 %v650, 32
  %v656 = vpop.permute.xlu0 %655
  %v657 = vmul.f32 %v652, %v572
  %v658 = vmul.f32 %v650, %v654
  %v659 = vadd.f32 %v657, %v658
  %v660 = vtanh.pop %v659
  %v661 = vmul.f32 %v656, %v660
  %s662 = scalar_lea.vmem %s1, 32
  %v663 = vld [vmem:[%s662] sm:$0xff]
  %v664 = vsub.f32 %v659, %v572
  %v665 = vmul.f32 %v663, %v664
  %v666 = vadd.f32 %v572, %v665
  %v667 = vsub.f32 %v661, %v575
  %v668 = vmul.f32 %v663, %v667
  %v669 = vadd.f32 %v575, %v668
  %670 = vmatprep.subr.mxu0 0.0
  %671 = vmatpush1.msra.mxu0 %v187
  %672 = vmatprep.subr.mxu0 0.0
  %673 = vmatpush1.msra.mxu0 %v188
  %674 = vmatprep.subr.mxu0 0.0
  %675 = vmatpush1.msra.mxu0 %v189
  %676 = vmatprep.subr.mxu0 0.0
  %677 = vmatpush1.msra.mxu0 %v190
  %678 = vmatprep.subr.mxu0 0.0
  %679 = vmatpush1.msra.mxu0 %v191
  %680 = vmatprep.subr.mxu0 0.0
  %681 = vmatpush1.msra.mxu0 %v192
  %682 = vmatprep.subr.mxu0 0.0
  %683 = vmatpush1.msra.mxu0 %v193
  %684 = vmatprep.subr.mxu0 0.0
  %685 = vmatpush1.msra.mxu0 %v194
  %686 = vmatprep.subr.mxu0 0.0
  %687 = vmatpush1.msra.mxu0 %v195
  %688 = vmatprep.subr.mxu0 0.0
  %689 = vmatpush1.msra.mxu0 %v196
  %690 = vmatprep.subr.mxu0 0.0
  %691 = vmatpush1.msra.mxu0 %v197
  %692 = vmatprep.subr.mxu0 0.0
  %693 = vmatpush1.msra.mxu0 %v198
  %694 = vmatprep.subr.mxu0 0.0
  %695 = vmatpush1.msra.mxu0 %v199
  %696 = vmatprep.subr.mxu0 0.0
  %697 = vmatpush1.msra.mxu0 %v200
  %698 = vmatprep.subr.mxu0 0.0
  %699 = vmatpush1.msra.mxu0 %v201
  %700 = vmatprep.subr.mxu0 0.0
  %701 = vmatpush1.msra.mxu0 %v202
  %702 = vmatprep.subr.mxu0 0.0
  %703 = vmatpush1.msra.mxu0 0.0
  %704 = vmatprep.subr.mxu0 0.0
  %705 = vmatpush1.msra.mxu0 0.0
  %706 = vmatprep.subr.mxu0 0.0
  %707 = vmatpush1.msra.mxu0 0.0
  %708 = vmatprep.subr.mxu0 0.0
  %709 = vmatpush1.msra.mxu0 0.0
  %710 = vmatprep.subr.mxu0 0.0
  %711 = vmatpush1.msra.mxu0 0.0
  %712 = vmatprep.subr.mxu0 0.0
  %713 = vmatpush1.msra.mxu0 0.0
  %714 = vmatprep.subr.mxu0 0.0
  %715 = vmatpush1.msra.mxu0 0.0
  %716 = vmatprep.subr.mxu0 0.0
  %717 = vmatpush1.msra.mxu0 0.0
  %718 = vmatprep.subr.mxu0 0.0
  %719 = vmatpush1.msra.mxu0 0.0
  %720 = vmatprep.subr.mxu0 0.0
  %721 = vmatpush1.msra.mxu0 0.0
  %722 = vmatprep.subr.mxu0 0.0
  %723 = vmatpush1.msra.mxu0 0.0
  %724 = vmatprep.subr.mxu0 0.0
  %725 = vmatpush1.msra.mxu0 0.0
  %726 = vmatprep.subr.mxu0 0.0
  %727 = vmatpush1.msra.mxu0 0.0
  %728 = vmatprep.subr.mxu0 0.0
  %729 = vmatpush1.msra.mxu0 0.0
  %730 = vmatprep.subr.mxu0 0.0
  %731 = vmatpush1.msra.mxu0 0.0
  %732 = vmatprep.subr.mxu0 0.0
  %733 = vmatpush1.msra.mxu0 0.0
  %734 = vmatprep.mubr.f32.mxu0 0.0
  %735 = vmatmul.mubr.f32.gmra.mrb[0].mxu0 %v669
  %v736 = vpop.f32.mrb[0].mxu0
  %v737 = vadd.f32 0.0, %v736
  %v738 = vpop.f32.mrb[0].mxu0
  %739 = vdwg.mxu0
  %v740 = vadd.f32 %v167, %v737
  %v741 = vmul.f32 %v740, %v185
  %v742 = vtanh.pop %v741
  %v743 = vmul.f32 %v742, %v185
  %v744 = vadd.f32 %v743, %v186
  %745 = vrot.lane.b32.xlu0 %v744, 96
  %v746 = vpop.permute.xlu0 %745
  %747 = vrot.lane.b32.xlu0 %v744, 64
  %v748 = vpop.permute.xlu0 %747
  %749 = vrot.lane.b32.xlu0 %v744, 32
  %v750 = vpop.permute.xlu0 %749
  %v751 = vmul.f32 %v746, %v666
  %v752 = vmul.f32 %v744, %v748
  %v753 = vadd.f32 %v751, %v752
  %v754 = vtanh.pop %v753
  %v755 = vmul.f32 %v750, %v754
  %s756 = scalar_lea.vmem %s1, 40
  %v757 = vld [vmem:[%s756] sm:$0xff]
  %v758 = vsub.f32 %v753, %v666
  %v759 = vmul.f32 %v757, %v758
  %v760 = vadd.f32 %v666, %v759
  %v761 = vsub.f32 %v755, %v669
  %v762 = vmul.f32 %v757, %v761
  %v763 = vadd.f32 %v669, %v762
  %764 = vmatprep.subr.mxu0 0.0
  %765 = vmatpush1.msra.mxu0 %v187
  %766 = vmatprep.subr.mxu0 0.0
  %767 = vmatpush1.msra.mxu0 %v188
  %768 = vmatprep.subr.mxu0 0.0
  %769 = vmatpush1.msra.mxu0 %v189
  %770 = vmatprep.subr.mxu0 0.0
  %771 = vmatpush1.msra.mxu0 %v190
  %772 = vmatprep.subr.mxu0 0.0
  %773 = vmatpush1.msra.mxu0 %v191
  %774 = vmatprep.subr.mxu0 0.0
  %775 = vmatpush1.msra.mxu0 %v192
  %776 = vmatprep.subr.mxu0 0.0
  %777 = vmatpush1.msra.mxu0 %v193
  %778 = vmatprep.subr.mxu0 0.0
  %779 = vmatpush1.msra.mxu0 %v194
  %780 = vmatprep.subr.mxu0 0.0
  %781 = vmatpush1.msra.mxu0 %v195
  %782 = vmatprep.subr.mxu0 0.0
  %783 = vmatpush1.msra.mxu0 %v196
  %784 = vmatprep.subr.mxu0 0.0
  %785 = vmatpush1.msra.mxu0 %v197
  %786 = vmatprep.subr.mxu0 0.0
  %787 = vmatpush1.msra.mxu0 %v198
  %788 = vmatprep.subr.mxu0 0.0
  %789 = vmatpush1.msra.mxu0 %v199
  %790 = vmatprep.subr.mxu0 0.0
  %791 = vmatpush1.msra.mxu0 %v200
  %792 = vmatprep.subr.mxu0 0.0
  %793 = vmatpush1.msra.mxu0 %v201
  %794 = vmatprep.subr.mxu0 0.0
  %795 = vmatpush1.msra.mxu0 %v202
  %796 = vmatprep.subr.mxu0 0.0
  %797 = vmatpush1.msra.mxu0 0.0
  %798 = vmatprep.subr.mxu0 0.0
  %799 = vmatpush1.msra.mxu0 0.0
  %800 = vmatprep.subr.mxu0 0.0
  %801 = vmatpush1.msra.mxu0 0.0
  %802 = vmatprep.subr.mxu0 0.0
  %803 = vmatpush1.msra.mxu0 0.0
  %804 = vmatprep.subr.mxu0 0.0
  %805 = vmatpush1.msra.mxu0 0.0
  %806 = vmatprep.subr.mxu0 0.0
  %807 = vmatpush1.msra.mxu0 0.0
  %808 = vmatprep.subr.mxu0 0.0
  %809 = vmatpush1.msra.mxu0 0.0
  %810 = vmatprep.subr.mxu0 0.0
  %811 = vmatpush1.msra.mxu0 0.0
  %812 = vmatprep.subr.mxu0 0.0
  %813 = vmatpush1.msra.mxu0 0.0
  %814 = vmatprep.subr.mxu0 0.0
  %815 = vmatpush1.msra.mxu0 0.0
  %816 = vmatprep.subr.mxu0 0.0
  %817 = vmatpush1.msra.mxu0 0.0
  %818 = vmatprep.subr.mxu0 0.0
  %819 = vmatpush1.msra.mxu0 0.0
  %820 = vmatprep.subr.mxu0 0.0
  %821 = vmatpush1.msra.mxu0 0.0
  %822 = vmatprep.subr.mxu0 0.0
  %823 = vmatpush1.msra.mxu0 0.0
  %824 = vmatprep.subr.mxu0 0.0
  %825 = vmatpush1.msra.mxu0 0.0
  %826 = vmatprep.subr.mxu0 0.0
  %827 = vmatpush1.msra.mxu0 0.0
  %828 = vmatprep.mubr.f32.mxu0 0.0
  %829 = vmatmul.mubr.f32.gmra.mrb[0].mxu0 %v763
  %v830 = vpop.f32.mrb[0].mxu0
  %v831 = vadd.f32 0.0, %v830
  %v832 = vpop.f32.mrb[0].mxu0
  %833 = vdwg.mxu0
  %v834 = vadd.f32 %v172, %v831
  %v835 = vmul.f32 %v834, %v185
  %v836 = vtanh.pop %v835
  %v837 = vmul.f32 %v836, %v185
  %v838 = vadd.f32 %v837, %v186
  %839 = vrot.lane.b32.xlu0 %v838, 96
  %v840 = vpop.permute.xlu0 %839
  %841 = vrot.lane.b32.xlu0 %v838, 64
  %v842 = vpop.permute.xlu0 %841
  %843 = vrot.lane.b32.xlu0 %v838, 32
  %v844 = vpop.permute.xlu0 %843
  %v845 = vmul.f32 %v840, %v760
  %v846 = vmul.f32 %v838, %v842
  %v847 = vadd.f32 %v845, %v846
  %v848 = vtanh.pop %v847
  %v849 = vmul.f32 %v844, %v848
  %s850 = scalar_lea.vmem %s1, 48
  %v851 = vld [vmem:[%s850] sm:$0xff]
  %v852 = vsub.f32 %v847, %v760
  %v853 = vmul.f32 %v851, %v852
  %v854 = vadd.f32 %v760, %v853
  %v855 = vsub.f32 %v849, %v763
  %v856 = vmul.f32 %v851, %v855
  %v857 = vadd.f32 %v763, %v856
  %858 = vmatprep.subr.mxu0 0.0
  %859 = vmatpush1.msra.mxu0 %v187
  %860 = vmatprep.subr.mxu0 0.0
  %861 = vmatpush1.msra.mxu0 %v188
  %862 = vmatprep.subr.mxu0 0.0
  %863 = vmatpush1.msra.mxu0 %v189
  %864 = vmatprep.subr.mxu0 0.0
  %865 = vmatpush1.msra.mxu0 %v190
  %866 = vmatprep.subr.mxu0 0.0
  %867 = vmatpush1.msra.mxu0 %v191
  %868 = vmatprep.subr.mxu0 0.0
  %869 = vmatpush1.msra.mxu0 %v192
  %870 = vmatprep.subr.mxu0 0.0
  %871 = vmatpush1.msra.mxu0 %v193
  %872 = vmatprep.subr.mxu0 0.0
  %873 = vmatpush1.msra.mxu0 %v194
  %874 = vmatprep.subr.mxu0 0.0
  %875 = vmatpush1.msra.mxu0 %v195
  %876 = vmatprep.subr.mxu0 0.0
  %877 = vmatpush1.msra.mxu0 %v196
  %878 = vmatprep.subr.mxu0 0.0
  %879 = vmatpush1.msra.mxu0 %v197
  %880 = vmatprep.subr.mxu0 0.0
  %881 = vmatpush1.msra.mxu0 %v198
  %882 = vmatprep.subr.mxu0 0.0
  %883 = vmatpush1.msra.mxu0 %v199
  %884 = vmatprep.subr.mxu0 0.0
  %885 = vmatpush1.msra.mxu0 %v200
  %886 = vmatprep.subr.mxu0 0.0
  %887 = vmatpush1.msra.mxu0 %v201
  %888 = vmatprep.subr.mxu0 0.0
  %889 = vmatpush1.msra.mxu0 %v202
  %890 = vmatprep.subr.mxu0 0.0
  %891 = vmatpush1.msra.mxu0 0.0
  %892 = vmatprep.subr.mxu0 0.0
  %893 = vmatpush1.msra.mxu0 0.0
  %894 = vmatprep.subr.mxu0 0.0
  %895 = vmatpush1.msra.mxu0 0.0
  %896 = vmatprep.subr.mxu0 0.0
  %897 = vmatpush1.msra.mxu0 0.0
  %898 = vmatprep.subr.mxu0 0.0
  %899 = vmatpush1.msra.mxu0 0.0
  %900 = vmatprep.subr.mxu0 0.0
  %901 = vmatpush1.msra.mxu0 0.0
  %902 = vmatprep.subr.mxu0 0.0
  %903 = vmatpush1.msra.mxu0 0.0
  %904 = vmatprep.subr.mxu0 0.0
  %905 = vmatpush1.msra.mxu0 0.0
  %906 = vmatprep.subr.mxu0 0.0
  %907 = vmatpush1.msra.mxu0 0.0
  %908 = vmatprep.subr.mxu0 0.0
  %909 = vmatpush1.msra.mxu0 0.0
  %910 = vmatprep.subr.mxu0 0.0
  %911 = vmatpush1.msra.mxu0 0.0
  %912 = vmatprep.subr.mxu0 0.0
  %913 = vmatpush1.msra.mxu0 0.0
  %914 = vmatprep.subr.mxu0 0.0
  %915 = vmatpush1.msra.mxu0 0.0
  %916 = vmatprep.subr.mxu0 0.0
  %917 = vmatpush1.msra.mxu0 0.0
  %918 = vmatprep.subr.mxu0 0.0
  %919 = vmatpush1.msra.mxu0 0.0
  %920 = vmatprep.subr.mxu0 0.0
  %921 = vmatpush1.msra.mxu0 0.0
  %922 = vmatprep.mubr.f32.mxu0 0.0
  %923 = vmatmul.mubr.f32.gmra.mrb[0].mxu0 %v857
  %v924 = vpop.f32.mrb[0].mxu0
  %v925 = vadd.f32 0.0, %v924
  %v926 = vpop.f32.mrb[0].mxu0
  %927 = vdwg.mxu0
  %v928 = vadd.f32 %v177, %v925
  %v929 = vmul.f32 %v928, %v185
  %v930 = vtanh.pop %v929
  %v931 = vmul.f32 %v930, %v185
  %v932 = vadd.f32 %v931, %v186
  %933 = vrot.lane.b32.xlu0 %v932, 96
  %v934 = vpop.permute.xlu0 %933
  %935 = vrot.lane.b32.xlu0 %v932, 64
  %v936 = vpop.permute.xlu0 %935
  %937 = vrot.lane.b32.xlu0 %v932, 32
  %v938 = vpop.permute.xlu0 %937
  %v939 = vmul.f32 %v934, %v854
  %v940 = vmul.f32 %v932, %v936
  %v941 = vadd.f32 %v939, %v940
  %v942 = vtanh.pop %v941
  %v943 = vmul.f32 %v938, %v942
  %s944 = scalar_lea.vmem %s1, 56
  %v945 = vld [vmem:[%s944] sm:$0xff]
  %v946 = vsub.f32 %v943, %v857
  %v947 = vmul.f32 %v945, %v946
  %v948 = vadd.f32 %v857, %v947
  %vm949 = vcmp.lt.s32.totalorder %v181, 32
  %v950 = vsel %vm949, %v948, 0.0
  %v951 = vld [vmem:[%s5] sm:$0xff]
  %vm952 = vcmask 7168
  %v953 = vsel %vm952, %v951, 0.0
  %v954 = vrot.slane %v953, 4
  %v955 = vadd.f32 %v953, %v954
  %v956 = vrot.slane %v955, 2
  %v957 = vadd.f32 %v955, %v956
  %v958 = vrot.slane %v957, 1
  %v959 = vadd.f32 %v957, %v958
  %v960 = vrcp.pop %v959
  %v961 = vmul.f32 %v951, %v960
  %963 = vset.pattern.permute.xlu0 0
  %964 = vperm.xlu0 %963, %v961
  %v965 = vpop.permute.xlu0 %964
  %v967 = vmul.f32 %v950, %v965
  %v968 = vrot.slane %v967, 4
  %v969 = vadd.f32 %v967, %v968
  %v970 = vrot.slane %v969, 2
  %v971 = vadd.f32 %v969, %v970
  %v972 = vrot.slane %v971, 1
  %v973 = vadd.f32 %v971, %v972
  %974 = vst [vmem:[%s8] sm:$0x1] %v973
  // Predicated region
  $region34: #{rnn_encoder_forward.1} parent=0 // pred_check
    _
  $region35: #{rnn_encoder_forward.1} parent=0 // pred_check_branch
    %976 = sbr.rel (0) target = $region37
  $region36: #{rnn_encoder_forward.1} parent=0 // pred_region
    _
  $region37: #{rnn_encoder_forward.1} parent=0 // pred_fallthru
    _
  // Predicated region
  $region38: #{rnn_encoder_forward.1} parent=0 // pred_check
    _
  $region39: #{rnn_encoder_forward.1} parent=0 // pred_check_branch
    %978 = sbr.rel (0) target = $region41
  $region40: #{rnn_encoder_forward.1} parent=0 // pred_region
    _
  $region41: #{rnn_encoder_forward.1} parent=0 // pred_fallthru
    _

</llo_original>
